<compile_context>
chip_gen: v6e
topology: v6e:2x2x1
jax: 0.10.0
libtpu: 0.0.40
codegen_flags: <defaults>
</compile_context>

<pallas_src>
import math
import numpy as np
import jax
import jax.numpy as jnp
from jax.experimental import pallas as pl
from jax.experimental.pallas import tpu as pltpu


# ----------------------------------------------------------------------------
# Pallas kernel: o = Wmat_rows @ x + bias   (one MXU matmul per block)
# ----------------------------------------------------------------------------
def _ld_toeplitz_kernel(b_ref, w_ref, x_ref, o_ref):
    # b_ref : SMEM (1,)             f32          conv bias
    # w_ref : VMEM (tile_t, T)      f32 / x-dtype  padding-folded Toeplitz rows
    # x_ref : VMEM (T, tile_n)      x dtype      lane-dense [time, batch*chan]
    # o_ref : VMEM (tile_t, tile_n) x dtype
    # f32 inputs: HIGHEST keeps exact-f32 MXU passes so numerics match the
    # per-tap reference; bf16 inputs go straight to the MXU (no f32 cast).
    prec = (jax.lax.Precision.HIGHEST
            if w_ref.dtype == jnp.float32 else jax.lax.Precision.DEFAULT)
    y = jnp.dot(w_ref[...], x_ref[...],
                preferred_element_type=jnp.float32, precision=prec)
    o_ref[...] = (y + b_ref[0]).astype(o_ref.dtype)


# ----------------------------------------------------------------------------
# Wrapper: x [B, T, C], weight [1, 1, K] (Conv1d weight), bias [1] -> [B, T, C]
# ----------------------------------------------------------------------------
def ld_forward(x, weight, bias):
    B, T, C = x.shape
    w = weight.reshape(-1).astype(jnp.float32)
    b = bias.reshape(-1).astype(jnp.float32)
    K = int(w.shape[0])
    # TODO(synk): even kernel_size changes the output length (T+1) in PyTorch;
    # this port supports the module's odd default (25).
    assert K % 2 == 1, "LD Pallas port assumes odd kernel_size"
    P = K // 2

    # Toeplitz matrix with replicate padding folded in:
    #   out[t] = bias + sum_k w[k] * x[clamp(t + k - P, 0, T-1)]
    # duplicate clamped indices at the edges are summed by the scatter-add.
    rows = jnp.arange(T, dtype=jnp.int32)[:, None]                 # [T, 1]
    taps = jnp.arange(K, dtype=jnp.int32)[None, :]                 # [1, K]
    src = jnp.clip(rows + taps - P, 0, T - 1)                      # [T, K]
    wmat = jnp.zeros((T, T), jnp.float32).at[
        jnp.broadcast_to(rows, (T, K)), src
    ].add(jnp.broadcast_to(w[None, :], (T, K)))
    if x.dtype != jnp.float32:
        # Feed bf16 straight to the MXU (f32 accumulate), no block-wide cast.
        wmat = wmat.astype(x.dtype)

    # Lane-dense layout: [B, T, C] -> [T, B*C]; pad lanes to a multiple of 128
    # so stores are full unmasked vst and batches fuse into large DMAs.
    N = B * C
    x2 = jnp.transpose(x, (1, 0, 2)).reshape(T, N)
    n_pad = int(pl.cdiv(N, 128)) * 128
    if n_pad != N:
        x2 = jnp.pad(x2, ((0, 0), (0, n_pad - N)))

    # Lane tiling (always a multiple of 128; >=2 tiles when N is big enough).
    if n_pad >= 1024 and n_pad % 512 == 0:
        tile_n = 512
    elif n_pad >= 512 and n_pad % 256 == 0:
        tile_n = 256
    elif n_pad >= 256:
        tile_n = 128
    else:
        tile_n = n_pad

    # Row (output-time) tiling: bounds the resident Toeplitz block for long T
    # and provides a second "parallel" grid axis for v7x's two TensorCores.
    tile_t = T
    if T % 8 == 0:
        for cand in (512, 256, 128, 64, 32, 16, 8):
            if T % cand == 0 and T // cand >= 2 and cand * T * 4 <= (8 << 20):
                tile_t = cand
                break
    # TODO(synk): for very long sequences a banded (tile_t x tile_t+2P) matrix
    # per row-tile would avoid the O(T^2) FLOPs of the full Toeplitz form.

    grid = (T // tile_t, n_pad // tile_n)

    x_item = jnp.dtype(x.dtype).itemsize
    w_item = jnp.dtype(wmat.dtype).itemsize
    vmem_need = (2 * tile_t * T * w_item          # Toeplitz rows (dbl-buffered)
                 + 2 * T * tile_n * x_item        # input blocks
                 + 2 * tile_t * tile_n * x_item)  # output blocks
    vmem_limit = int(min(max(2 * vmem_need, 16 << 20), 48 << 20))

    cost = pl.CostEstimate(
        flops=2 * T * T * n_pad,
        transcendentals=0,
        bytes_accessed=T * T * w_item + 2 * T * n_pad * x_item,
    )

    out2 = pl.pallas_call(
        _ld_toeplitz_kernel,
        out_shape=jax.ShapeDtypeStruct((T, n_pad), x.dtype),
        grid=grid,
        in_specs=[
            pl.BlockSpec(memory_space=pltpu.MemorySpace.SMEM),      # bias
            pl.BlockSpec((tile_t, T), lambda ti, ni: (ti, 0)),      # Toeplitz
            pl.BlockSpec((T, tile_n), lambda ti, ni: (0, ni)),      # x slab
        ],
        out_specs=pl.BlockSpec((tile_t, tile_n), lambda ti, ni: (ti, ni)),
        compiler_params=pltpu.CompilerParams(
            dimension_semantics=("parallel", "parallel"),
            vmem_limit_bytes=vmem_limit,
        ),
        cost_estimate=cost,
    )(b, wmat, x2)

    out = out2[:, :N].reshape(T, B, C)
    return jnp.transpose(out, (1, 0, 2))


# ----------------------------------------------------------------------------
# Pure-JAX reference (mirrors the PyTorch forward) for correctness check
# ----------------------------------------------------------------------------
def _ref_ld(x, weight, bias):
    B, T, C = x.shape
    w = weight.reshape(-1).astype(jnp.float32)
    b = bias.reshape(-1).astype(jnp.float32)
    K = w.shape[0]
    P = K // 2
    xt = jnp.transpose(x, (0, 2, 1)).astype(jnp.float32)        # [B, C, T]
    xp = jnp.pad(xt, ((0, 0), (0, 0), (P, P)), mode="edge")     # replicate pad
    out = jnp.zeros((B, C, T), jnp.float32)
    for k in range(K):                                          # cross-correlation
        out = out + w[k] * xp[:, :, k:k + T]
    out = out + b[0]
    return jnp.transpose(out, (0, 2, 1)).astype(x.dtype)        # [B, T, C]


# ----------------------------------------------------------------------------
# Deterministic parameter init exactly as in LD.__init__
# ----------------------------------------------------------------------------
def init_ld_params(kernel_size=25):
    kh = kernel_size // 2
    sigma = 1.0
    logits = jnp.array(
        [math.exp(-((i - kh) / (2 * sigma)) ** 2) for i in range(kernel_size)],
        dtype=jnp.float32,
    )
    weight = jax.nn.softmax(logits, axis=-1).reshape(1, 1, kernel_size)
    bias = jnp.zeros((1,), jnp.float32)
    return weight, bias


if __name__ == "__main__":
    # Small config: batch=2, time=16, channels=4, default kernel_size=25.
    B, T, C = 2, 16, 4
    kernel_size = 25

    key = jax.random.PRNGKey(0)
    x = jax.random.normal(key, (B, T, C), dtype=jnp.float32)
    weight, bias = init_ld_params(kernel_size)

    out = ld_forward(x, weight, bias)
    out = jax.block_until_ready(out)

    ref = _ref_ld(x, weight, bias)
    assert out.shape == ref.shape == (B, T, C), (out.shape, ref.shape)
    np.testing.assert_allclose(np.asarray(out), np.asarray(ref),
                               rtol=1e-5, atol=1e-5)

    print("KERNEL_OK")
</pallas_src>

<mosaic_0001>
module attributes {stable_mosaic.version = 11 : i64} {
  func.func @_ld_toeplitz_kernel(%arg0: i32, %arg1: i32, %arg2: memref<1xf32, #tpu.memory_space<smem>>, %arg3: memref<8x16xf32, #tpu.memory_space<vmem>>, %arg4: memref<16x128xf32, #tpu.memory_space<vmem>>, %arg5: memref<8x128xf32, #tpu.memory_space<vmem>>) attributes {dimension_semantics = [#tpu.dimension_semantics<parallel>, #tpu.dimension_semantics<parallel>], iteration_bounds = array<i64: 2, 1>, scalar_prefetch = 0 : i64, scratch_operands = 0 : i64, tpu.core_type = #tpu.core_type<tc>, window_params = [{transform_indices = @transform_0, window_bounds = array<i64: 1>}, {transform_indices = @transform_1, window_bounds = array<i64: 8, 16>}, {transform_indices = @transform_2, window_bounds = array<i64: 16, 128>}, {transform_indices = @transform_3, window_bounds = array<i64: 8, 128>}]} {
    %c0 = arith.constant 0 : index
    %c0_0 = arith.constant 0 : index
    %0 = vector.load %arg3[%c0, %c0_0] : memref<8x16xf32, #tpu.memory_space<vmem>>, vector<8x16xf32>
    %c0_1 = arith.constant 0 : index
    %c0_2 = arith.constant 0 : index
    %1 = vector.load %arg4[%c0_1, %c0_2] : memref<16x128xf32, #tpu.memory_space<vmem>>, vector<16x128xf32>
    %cst = arith.constant dense<0.000000e+00> : vector<8x128xf32>
    %2 = tpu.matmul %0, %1, %cst {dimension_numbers = #tpu.dot_dimension_numbers<[1], [0], [0], [1], [0, 0, 1, 1], [], []>, precision = #tpu.contract_precision<fp32>} : vector<8x16xf32>, vector<16x128xf32>, vector<8x128xf32> -> vector<8x128xf32>
    %c0_3 = arith.constant 0 : index
    %3 = memref.load %arg2[%c0_3] : memref<1xf32, #tpu.memory_space<smem>>
    %4 = vector.broadcast %3 : f32 to vector<8x128xf32>
    %5 = arith.addf %2, %4 : vector<8x128xf32>
    %c0_4 = arith.constant 0 : index
    %c0_5 = arith.constant 0 : index
    %6 = vector.load %arg5[%c0_4, %c0_5] : memref<8x128xf32, #tpu.memory_space<vmem>>, vector<8x128xf32>
    tpu.vector_store %arg5[%c0_4, %c0_5], %5 {strides = array<i32>} : memref<8x128xf32, #tpu.memory_space<vmem>>, vector<8x128xf32>,
    return
  }
  func.func @transform_0(%arg0: i32, %arg1: i32) -> i32 {
    %c0_i32 = arith.constant 0 : i32
    %c0_i32_0 = arith.constant 0 : i32
    return %c0_i32 : i32
  }
  func.func @transform_1(%arg0: i32, %arg1: i32) -> (i32, i32) {
    %c0_i32 = arith.constant 0 : i32
    %c0_i32_0 = arith.constant 0 : i32
    return %arg0, %c0_i32 : i32, i32
  }
  func.func @transform_2(%arg0: i32, %arg1: i32) -> (i32, i32) {
    %c0_i32 = arith.constant 0 : i32
    %c0_i32_0 = arith.constant 0 : i32
    return %c0_i32, %arg1 : i32, i32
  }
  func.func @transform_3(%arg0: i32, %arg1: i32) -> (i32, i32) {
    %c0_i32 = arith.constant 0 : i32
    return %arg0, %arg1 : i32, i32
  }
}

</mosaic_0001>

<llo_original>
// kernel: tpu_custom_call.1
$region0: #{tpu_custom_call.1}
  #allocation0 [shape = 'u32[]', space=smem, size = 0x4, offset = 0x4, fixed_abs, tag = 'smem constant byte address 0x4 - core index']
  #allocation1 [shape = 'u32[144,128]{1,0:T(1,128)}', space=vmem, size = 0x12000, scoped, tag = 'internal scratch']
  #allocation2 [shape = 'f32[1]{0:T(128)S(6)}', space=smem, size = 0x200, scoped, tag = 'scoped memory for tpu_custom_call.1']
  %s0 = inlined_call_operand.<no memory space> [shape: f32[1], index: 0, kind: input, shape index: {}]
  %s1 = inlined_call_operand.hbm [shape: f32[16,16], index: 1, kind: input, shape index: {}]
  %s2 = inlined_call_operand.hbm [shape: f32[16,128], index: 2, kind: input, shape index: {}]
  %s3 = inlined_call_operand.hbm [shape: f32[16,128], index: 3, kind: output, shape index: {}]
  %s4 = sld [smem:[#allocation0]]
  $region53: #{tpu_custom_call.1} parent=0
    _
  %s6 = ssub.s32 1, %s4
  %s7 = scalar_select 0, %s6, %s4
  %8 = sst [smem:[#allocation2]] %s0
  $region1: #{tpu_custom_call.1} parent=0
    #allocation3 [shape = 'u8[8192]{0}', space=vmem, size = 0x2000, scoped, tag = 'input window, operand 1']
    #allocation4 [shape = 's32[2]{0}', space=sflag, size = 0x8, scoped, tag = 'scoped memory for tpu_custom_call.1']
    #allocation5 [shape = 's32[2]{0}', space=sflag, size = 0x8, scoped, tag = 'scoped memory for tpu_custom_call.1']
    #allocation6 [shape = 'u8[8192]{0}', space=vmem, size = 0x2000, scoped, tag = 'input window, operand 2, single buffered']
    #allocation7 [shape = 's32[1]{0}', space=sflag, size = 0x4, scoped, tag = 'scoped memory for tpu_custom_call.1']
    #allocation8 [shape = 'u8[8192]{0}', space=vmem, size = 0x2000, scoped, tag = 'output window, operand 0']
    %9 = vsyncpa [#allocation4], 0
    %s10 = scalar_lea.sflag [#allocation4], 1
    %11 = vsyncpa %s10, 0
    %12 = vsyncpa [#allocation7], 0
    %13 = vsyncpa [#allocation5], 0
    %s14 = scalar_lea.sflag [#allocation5], 1
    %15 = vsyncpa %s14, 0
    loop: start=0, step=1, limit=4
    $region2: #{tpu_custom_call.1} parent=1 // loop_pre_header
      _
    $region3: #{tpu_custom_call.1} parent=1 // loop_header
      %s17 = sphi 0, %s21
      %p18 = scmp.ge.s32.totalorder %s17, 4
      %s24 = sphi 0, %s36
      %s25 = sphi 0, %s32
      %s26 = sphi 0, %s24
      %s27 = sphi 0, %s25
      %s28 = sphi 0, %s26
      %s29 = sphi 0, %s27
      %s37 = sphi 0, %s37
      %s39 = sphi 0, %s37
      %s40 = sphi 0, %s39
      %s54 = sphi 0, %s40
      %s60 = sphi 0, %s62
      %s63 = sphi 0, %s60
      %s64 = sphi 0, %s63
      %s80 = sphi 0, %s64
      %s86 = sphi 0, %s88
      %s89 = sphi 0, %s86
      %s90 = sphi 0, %s89
      %s106 = sphi 0, %s90
      %s114 = sphi 0, %s116
      %s117 = sphi 0, %s114
      %s118 = sphi 0, %s117
      %s134 = sphi 0, %s118
    $region4: #{tpu_custom_call.1} parent=1 // loop_header_branch
      %20 = sbr.rel (%p18) target = $region8
    $region5: #{tpu_custom_call.1} parent=1 // loop_body
      %s22 = ssub.s32 %s17, 1
      %s23 = ssub.s32 %s17, 2
      %s30 = sadd.s32 1, %s25
      %p31 = scmp.ge.s32.totalorder %s30, 1
      %s32 = scalar_select %p31, 0, %s30
      %s33 = sadd.s32 1, %s24
      %s34 = scalar_select %p31, %s33, %s24
      %p35 = scmp.ge.s32.totalorder %s34, 2
      %s36 = scalar_select %p35, 0, %s34
      %s38 = sadd.s32 %s37, 1
      %p41 = scmp.eq.s32.totalorder %s17, 1
      %p42 = scmp.ne.s32.totalorder %s37, %s39
      %p43 = scmp.eq.s32.totalorder %s17, 0
      %p44 = por %p42, %p43
      %p45 = scmp.ne.s32.totalorder %s37, %s39
      %p46 = scmp.eq.s32.totalorder %s22, 1
      %p47 = por %p45, %p46
      %p48 = scmp.ne.s32.totalorder %s39, %s40
      %p49 = scmp.eq.s32.totalorder %s22, 0
      %p50 = por %p48, %p49
      %p51 = scmp.ne.s32.totalorder %s39, %s40
      %p52 = scmp.eq.s32.totalorder %s23, 1
      %p53 = por %p51, %p52
      %p55 = scmp.ne.s32.totalorder %s40, %s54
      %p56 = scmp.eq.s32.totalorder %s23, 0
      %p57 = por %p55, %p56
      %s58 = ssub.s32 %s24, %s36
      %p59 = scmp.eq.s32.totalorder %s58, 0
      %s61 = sadd.s32 %s60, 1
      %s62 = scalar_select %p59, %s60, %s61
      %p65 = pneg %p59
      %p66 = scmp.eq.s32.totalorder %s17, 1
      %p67 = por %p65, %p66
      %p68 = scmp.ne.s32.totalorder %s60, %s63
      %p69 = scmp.eq.s32.totalorder %s17, 0
      %p70 = por %p68, %p69
      %p71 = scmp.ne.s32.totalorder %s60, %s63
      %p72 = scmp.eq.s32.totalorder %s22, 1
      %p73 = por %p71, %p72
      %p74 = scmp.ne.s32.totalorder %s63, %s64
      %p75 = scmp.eq.s32.totalorder %s22, 0
      %p76 = por %p74, %p75
      %p77 = scmp.ne.s32.totalorder %s63, %s64
      %p78 = scmp.eq.s32.totalorder %s23, 1
      %p79 = por %p77, %p78
      %p81 = scmp.ne.s32.totalorder %s64, %s80
      %p82 = scmp.eq.s32.totalorder %s23, 0
      %p83 = por %p81, %p82
      %s84 = ssub.s32 %s25, %s32
      %p85 = scmp.eq.s32.totalorder %s84, 0
      %s87 = sadd.s32 %s86, 1
      %s88 = scalar_select %p85, %s86, %s87
      %p91 = pneg %p85
      %p92 = scmp.eq.s32.totalorder %s17, 1
      %p93 = por %p91, %p92
      %p94 = scmp.ne.s32.totalorder %s86, %s89
      %p95 = scmp.eq.s32.totalorder %s17, 0
      %p96 = por %p94, %p95
      %p97 = scmp.ne.s32.totalorder %s86, %s89
      %p98 = scmp.eq.s32.totalorder %s22, 1
      %p99 = por %p97, %p98
      %p100 = scmp.ne.s32.totalorder %s89, %s90
      %p101 = scmp.eq.s32.totalorder %s22, 0
      %p102 = por %p100, %p101
      %p103 = scmp.ne.s32.totalorder %s89, %s90
      %p104 = scmp.eq.s32.totalorder %s23, 1
      %p105 = por %p103, %p104
      %p107 = scmp.ne.s32.totalorder %s90, %s106
      %p108 = scmp.eq.s32.totalorder %s23, 0
      %p109 = por %p107, %p108
      %s110 = ssub.s32 %s24, %s36
      %s111 = ssub.s32 %s25, %s32
      %s112 = sor.u32 %s110, %s111
      %p113 = scmp.eq.s32.totalorder %s112, 0
      %s115 = sadd.s32 %s114, 1
      %s116 = scalar_select %p113, %s114, %s115
      %p119 = pneg %p113
      %p120 = scmp.eq.s32.totalorder %s17, 1
      %p121 = por %p119, %p120
      %p122 = scmp.ne.s32.totalorder %s114, %s117
      %p123 = scmp.eq.s32.totalorder %s17, 0
      %p124 = por %p122, %p123
      %p125 = scmp.ne.s32.totalorder %s114, %s117
      %p126 = scmp.eq.s32.totalorder %s22, 1
      %p127 = por %p125, %p126
      %p128 = scmp.ne.s32.totalorder %s117, %s118
      %p129 = scmp.eq.s32.totalorder %s22, 0
      %p130 = por %p128, %p129
      %p131 = scmp.ne.s32.totalorder %s117, %s118
      %p132 = scmp.eq.s32.totalorder %s23, 1
      %p133 = por %p131, %p132
      %p135 = scmp.ne.s32.totalorder %s118, %s134
      %p136 = scmp.eq.s32.totalorder %s23, 0
      %p137 = por %p135, %p136
      %p138 = scmp.le.s32.totalorder 1, %s17
      %p139 = scmp.lt.s32.totalorder %s17, 3
      %p140 = pnand %p138, %p139
      %p141 = pneg %p140
      // Predicated region
      $region9: #{tpu_custom_call.1} parent=5 // pred_check
        _
      $region10: #{tpu_custom_call.1} parent=5 // pred_check_branch
        %143 = sbr.rel (%p140) target = $region12
      $region11: #{tpu_custom_call.1} parent=5 // pred_region
        %s144 = ssub.s32 %s17, 1
        // Predicated region
        $region13: #{tpu_custom_call.1} parent=11 // pred_check
          %p145 = pneg %p50
        $region14: #{tpu_custom_call.1} parent=11 // pred_check_branch
          %147 = sbr.rel (%p145) target = $region16
        $region15: #{tpu_custom_call.1} parent=11 // pred_region
          _
        $region16: #{tpu_custom_call.1} parent=11 // pred_fallthru
          _
        // Predicated region
        $region17: #{tpu_custom_call.1} parent=11 // pred_check
          %p148 = pneg %p102
        $region18: #{tpu_custom_call.1} parent=11 // pred_check_branch
          %150 = sbr.rel (%p148) target = $region20
        $region19: #{tpu_custom_call.1} parent=11 // pred_region
          %s152 = ssub.s32 256, 256
          %153 = vsyncadd [#allocation7], %s152
          %s154 = smul.addr %s27, 128
          %s155 = scalar_lea.hbm %s2, %s154
          %s156 = sshll.u32 [#allocation6], 4
          %s157 = int_to_ptr.vmem [resolvable:$true] %s156
          %162 = dma.hbm_to_vmem [thread:$0]  %s155, 256, %s157, [#allocation7], 128, 128, 8
        $region20: #{tpu_custom_call.1} parent=11 // pred_fallthru
          _
      $region12: #{tpu_custom_call.1} parent=5 // pred_fallthru
        _
      %p163 = scmp.lt.s32.totalorder %s17, 2
      // Predicated region
      $region21: #{tpu_custom_call.1} parent=5 // pred_check
        %p164 = pneg %p163
      $region22: #{tpu_custom_call.1} parent=5 // pred_check_branch
        %166 = sbr.rel (%p164) target = $region24
      $region23: #{tpu_custom_call.1} parent=5 // pred_region
        // Predicated region
        $region25: #{tpu_custom_call.1} parent=23 // pred_check
          %p167 = pneg %p70
        $region26: #{tpu_custom_call.1} parent=23 // pred_check_branch
          %169 = sbr.rel (%p167) target = $region28
        $region27: #{tpu_custom_call.1} parent=23 // pred_region
          %s170 = sand.u32 %s60, 1
          %s171 = scalar_lea.sflag [#allocation4], %s170
          %s172 = sand.u32 %s60, 1
          %s173 = smul.addr %s172, 8
          %s174 = scalar_lea.vmem [#allocation3], %s173
          %s176 = ssub.s32 128, 128
          %177 = vsyncadd %s171, %s176
          %s178 = smul.addr %s24, 128
          %s179 = scalar_lea.hbm %s1, %s178
          %s181 = sshll.u32 %s174, 4
          %s182 = int_to_ptr.vmem [resolvable:$true] %s181
          %184 = dma.hbm_to_vmem [thread:$0]  %s179, 128, %s182, %s171
        $region28: #{tpu_custom_call.1} parent=23 // pred_fallthru
          _
      $region24: #{tpu_custom_call.1} parent=5 // pred_fallthru
        _
      %p185 = scmp.le.s32.totalorder 1, %s17
      %p186 = scmp.lt.s32.totalorder %s17, 3
      %p187 = pnand %p185, %p186
      %p188 = pneg %p187
      // Predicated region
      $region29: #{tpu_custom_call.1} parent=5 // pred_check
        _
      $region30: #{tpu_custom_call.1} parent=5 // pred_check_branch
        %190 = sbr.rel (%p187) target = $region32
      $region31: #{tpu_custom_call.1} parent=5 // pred_region
        %s191 = ssub.s32 %s17, 1
        %s192 = sand.u32 %s63, 1
        %s193 = scalar_lea.sflag [#allocation4], %s192
        %s194 = sand.u32 %s63, 1
        %s195 = smul.addr %s194, 8
        %s196 = scalar_lea.vmem [#allocation3], %s195
        // Predicated region
        $region33: #{tpu_custom_call.1} parent=31 // pred_check
          %p197 = pneg %p76
        $region34: #{tpu_custom_call.1} parent=31 // pred_check_branch
          %199 = sbr.rel (%p197) target = $region36
        $region35: #{tpu_custom_call.1} parent=31 // pred_region
          %200 = dma.done %s193, 128
        $region36: #{tpu_custom_call.1} parent=31 // pred_fallthru
          _
        // Predicated region
        $region37: #{tpu_custom_call.1} parent=31 // pred_check
          %p201 = pneg %p102
        $region38: #{tpu_custom_call.1} parent=31 // pred_check_branch
          %203 = sbr.rel (%p201) target = $region40
        $region39: #{tpu_custom_call.1} parent=31 // pred_region
          %204 = dma.done [#allocation7], 256
        $region40: #{tpu_custom_call.1} parent=31 // pred_fallthru
          _
        %p205 = pneg %p50
        %p206 = pneg %p47
        %s207 = sand.u32 %s63, 1
        %s208 = scalar_lea.sflag [#allocation4], %s207
        %s209 = sand.u32 %s63, 1
        %s210 = smul.addr %s209, 8
        %s211 = scalar_lea.vmem [#allocation3], %s210
        %p212 = pneg %p76
        %p213 = pneg %p73
        %p214 = pneg %p102
        %p215 = pneg %p99
        %p216 = pneg %p130
        %p217 = pneg %p127
        %s218 = sand.u32 %s117, 1
        %s219 = scalar_lea.sflag [#allocation5], %s218
        %s220 = sand.u32 %s117, 1
        %s221 = smul.addr %s220, 8
        %s222 = scalar_lea.vmem [#allocation8], %s221
        %v223 = vld [vmem:[%s196] sm:$0xff]
        %v224 = vld [vmem:[#allocation6] sm:$0xff]
        %v225 = vld [vmem:[#allocation6 + $0x8] sm:$0xff]
        %s226 = sld [smem:[#allocation2]]
        %v227 = vstv %s226
        %vm228 = vcmask 130048
        %v230 = vsel %vm228, %v223, 0
        %232 = vmatprep.subr.mxu0 0.0
        %233 = vmatpush1.msra.mxu0 0.0
        %234 = vmatprep.subr.mxu0 0.0
        %235 = vmatpush1.msra.mxu0 0.0
        %236 = vmatprep.subr.mxu0 0.0
        %237 = vmatpush1.msra.mxu0 0.0
        %238 = vmatprep.subr.mxu0 0.0
        %239 = vmatpush1.msra.mxu0 0.0
        %240 = vmatprep.subr.mxu0 0.0
        %241 = vmatpush1.msra.mxu0 0.0
        %242 = vmatprep.subr.mxu0 0.0
        %243 = vmatpush1.msra.mxu0 0.0
        %244 = vmatprep.subr.mxu0 0.0
        %245 = vmatpush1.msra.mxu0 0.0
        %246 = vmatprep.subr.mxu0 0.0
        %247 = vmatpush1.msra.mxu0 0.0
        %248 = vmatprep.subr.mxu0 0.0
        %249 = vmatpush1.msra.mxu0 0.0
        %250 = vmatprep.subr.mxu0 0.0
        %251 = vmatpush1.msra.mxu0 0.0
        %252 = vmatprep.subr.mxu0 0.0
        %253 = vmatpush1.msra.mxu0 0.0
        %254 = vmatprep.subr.mxu0 0.0
        %255 = vmatpush1.msra.mxu0 0.0
        %256 = vmatprep.subr.mxu0 0.0
        %257 = vmatpush1.msra.mxu0 0.0
        %258 = vmatprep.subr.mxu0 0.0
        %259 = vmatpush1.msra.mxu0 0.0
        %260 = vmatprep.subr.mxu0 0.0
        %v261 = vand.u32 %v225, 4294901760
        %262 = vmatpush1.msra.mxu0 %v261
        %263 = vmatprep.subr.mxu0 0.0
        %v264 = vand.u32 %v224, 4294901760
        %265 = vmatpush1.msra.mxu0 %v264
        %266 = vmatprep.subr.mxu0 0.0
        %267 = vmatpush2.msra.mxu0 0.0
        %268 = vmatprep.subr.mxu0 0.0
        %269 = vmatpush2.msra.mxu0 0.0
        %270 = vmatprep.subr.mxu0 0.0
        %271 = vmatpush2.msra.mxu0 0.0
        %272 = vmatprep.subr.mxu0 0.0
        %273 = vmatpush2.msra.mxu0 0.0
        %274 = vmatprep.subr.mxu0 0.0
        %275 = vmatpush2.msra.mxu0 0.0
        %276 = vmatprep.subr.mxu0 0.0
        %277 = vmatpush2.msra.mxu0 0.0
        %278 = vmatprep.subr.mxu0 0.0
        %279 = vmatpush2.msra.mxu0 0.0
        %280 = vmatprep.subr.mxu0 0.0
        %281 = vmatpush2.msra.mxu0 0.0
        %282 = vmatprep.subr.mxu0 0.0
        %283 = vmatpush2.msra.mxu0 0.0
        %284 = vmatprep.subr.mxu0 0.0
        %285 = vmatpush2.msra.mxu0 0.0
        %286 = vmatprep.subr.mxu0 0.0
        %287 = vmatpush2.msra.mxu0 0.0
        %288 = vmatprep.subr.mxu0 0.0
        %289 = vmatpush2.msra.mxu0 0.0
        %290 = vmatprep.subr.mxu0 0.0
        %291 = vmatpush2.msra.mxu0 0.0
        %292 = vmatprep.subr.mxu0 0.0
        %293 = vmatpush2.msra.mxu0 0.0
        %294 = vmatprep.subr.mxu0 0.0
        %295 = vmatpush2.msra.mxu0 0.0
        %296 = vmatprep.subr.mxu0 0.0
        %297 = vmatpush2.msra.mxu0 0.0
        %298 = vmatprep.mubr.f32.mxu0 0.0
        %v299 = vand.u32 %v230, 4294901760
        %v300 = vsub.f32 %v230, %v299
        %v301 = vand.u32 %v300, 4294901760
        %v302 = vsub.f32 %v300, %v301
        %v303 = vand.u32 %v302, 4294901760
        %304 = vmatmul.mubr.f32.gmra.mxu0 %v303
        %v305 = vpop.f32.mrf.mxu0
        %v306 = vadd.f32 %v227, %v305
        %v307 = vpop.f32.mrf.mxu0
        %308 = vdwg.mxu0
        %309 = vmatprep.subr.mxu0 0.0
        %310 = vmatpush1.msra.mxu0 0.0
        %311 = vmatprep.subr.mxu0 0.0
        %312 = vmatpush1.msra.mxu0 0.0
        %313 = vmatprep.subr.mxu0 0.0
        %314 = vmatpush1.msra.mxu0 0.0
        %315 = vmatprep.subr.mxu0 0.0
        %316 = vmatpush1.msra.mxu0 0.0
        %317 = vmatprep.subr.mxu0 0.0
        %318 = vmatpush1.msra.mxu0 0.0
        %319 = vmatprep.subr.mxu0 0.0
        %320 = vmatpush1.msra.mxu0 0.0
        %321 = vmatprep.subr.mxu0 0.0
        %322 = vmatpush1.msra.mxu0 0.0
        %323 = vmatprep.subr.mxu0 0.0
        %324 = vmatpush1.msra.mxu0 0.0
        %325 = vmatprep.subr.mxu0 0.0
        %326 = vmatpush1.msra.mxu0 0.0
        %327 = vmatprep.subr.mxu0 0.0
        %328 = vmatpush1.msra.mxu0 0.0
        %329 = vmatprep.subr.mxu0 0.0
        %330 = vmatpush1.msra.mxu0 0.0
        %331 = vmatprep.subr.mxu0 0.0
        %332 = vmatpush1.msra.mxu0 0.0
        %333 = vmatprep.subr.mxu0 0.0
        %334 = vmatpush1.msra.mxu0 0.0
        %335 = vmatprep.subr.mxu0 0.0
        %336 = vmatpush1.msra.mxu0 0.0
        %337 = vmatprep.subr.mxu0 0.0
        %v338 = vand.u32 %v225, 4294901760
        %v339 = vsub.f32 %v225, %v338
        %v340 = vand.u32 %v339, 4294901760
        %v341 = vsub.f32 %v339, %v340
        %v342 = vand.u32 %v341, 4294901760
        %343 = vmatpush1.msra.mxu0 %v342
        %344 = vmatprep.subr.mxu0 0.0
        %v345 = vand.u32 %v224, 4294901760
        %v346 = vsub.f32 %v224, %v345
        %v347 = vand.u32 %v346, 4294901760
        %v348 = vsub.f32 %v346, %v347
        %v349 = vand.u32 %v348, 4294901760
        %350 = vmatpush1.msra.mxu0 %v349
        %351 = vmatprep.subr.mxu0 0.0
        %352 = vmatpush2.msra.mxu0 0.0
        %353 = vmatprep.subr.mxu0 0.0
        %354 = vmatpush2.msra.mxu0 0.0
        %355 = vmatprep.subr.mxu0 0.0
        %356 = vmatpush2.msra.mxu0 0.0
        %357 = vmatprep.subr.mxu0 0.0
        %358 = vmatpush2.msra.mxu0 0.0
        %359 = vmatprep.subr.mxu0 0.0
        %360 = vmatpush2.msra.mxu0 0.0
        %361 = vmatprep.subr.mxu0 0.0
        %362 = vmatpush2.msra.mxu0 0.0
        %363 = vmatprep.subr.mxu0 0.0
        %364 = vmatpush2.msra.mxu0 0.0
        %365 = vmatprep.subr.mxu0 0.0
        %366 = vmatpush2.msra.mxu0 0.0
        %367 = vmatprep.subr.mxu0 0.0
        %368 = vmatpush2.msra.mxu0 0.0
        %369 = vmatprep.subr.mxu0 0.0
        %370 = vmatpush2.msra.mxu0 0.0
        %371 = vmatprep.subr.mxu0 0.0
        %372 = vmatpush2.msra.mxu0 0.0
        %373 = vmatprep.subr.mxu0 0.0
        %374 = vmatpush2.msra.mxu0 0.0
        %375 = vmatprep.subr.mxu0 0.0
        %376 = vmatpush2.msra.mxu0 0.0
        %377 = vmatprep.subr.mxu0 0.0
        %378 = vmatpush2.msra.mxu0 0.0
        %379 = vmatprep.subr.mxu0 0.0
        %380 = vmatpush2.msra.mxu0 0.0
        %381 = vmatprep.subr.mxu0 0.0
        %382 = vmatpush2.msra.mxu0 0.0
        %383 = vmatprep.mubr.f32.mxu0 0.0
        %v384 = vand.u32 %v230, 4294901760
        %385 = vmatmul.mubr.f32.gmra.mxu0 %v384
        %v386 = vpop.f32.mrf.mxu0
        %v387 = vadd.f32 %v306, %v386
        %v388 = vpop.f32.mrf.mxu0
        %389 = vdwg.mxu0
        %390 = vmatprep.subr.mxu0 0.0
        %391 = vmatpush1.msra.mxu0 0.0
        %392 = vmatprep.subr.mxu0 0.0
        %393 = vmatpush1.msra.mxu0 0.0
        %394 = vmatprep.subr.mxu0 0.0
        %395 = vmatpush1.msra.mxu0 0.0
        %396 = vmatprep.subr.mxu0 0.0
        %397 = vmatpush1.msra.mxu0 0.0
        %398 = vmatprep.subr.mxu0 0.0
        %399 = vmatpush1.msra.mxu0 0.0
        %400 = vmatprep.subr.mxu0 0.0
        %401 = vmatpush1.msra.mxu0 0.0
        %402 = vmatprep.subr.mxu0 0.0
        %403 = vmatpush1.msra.mxu0 0.0
        %404 = vmatprep.subr.mxu0 0.0
        %405 = vmatpush1.msra.mxu0 0.0
        %406 = vmatprep.subr.mxu0 0.0
        %407 = vmatpush1.msra.mxu0 0.0
        %408 = vmatprep.subr.mxu0 0.0
        %409 = vmatpush1.msra.mxu0 0.0
        %410 = vmatprep.subr.mxu0 0.0
        %411 = vmatpush1.msra.mxu0 0.0
        %412 = vmatprep.subr.mxu0 0.0
        %413 = vmatpush1.msra.mxu0 0.0
        %414 = vmatprep.subr.mxu0 0.0
        %415 = vmatpush1.msra.mxu0 0.0
        %416 = vmatprep.subr.mxu0 0.0
        %417 = vmatpush1.msra.mxu0 0.0
        %418 = vmatprep.subr.mxu0 0.0
        %v419 = vand.u32 %v225, 4294901760
        %v420 = vsub.f32 %v225, %v419
        %421 = vmatpush1.msra.mxu0 %v420
        %422 = vmatprep.subr.mxu0 0.0
        %v423 = vand.u32 %v224, 4294901760
        %v424 = vsub.f32 %v224, %v423
        %425 = vmatpush1.msra.mxu0 %v424
        %426 = vmatprep.subr.mxu0 0.0
        %427 = vmatpush2.msra.mxu0 0.0
        %428 = vmatprep.subr.mxu0 0.0
        %429 = vmatpush2.msra.mxu0 0.0
        %430 = vmatprep.subr.mxu0 0.0
        %431 = vmatpush2.msra.mxu0 0.0
        %432 = vmatprep.subr.mxu0 0.0
        %433 = vmatpush2.msra.mxu0 0.0
        %434 = vmatprep.subr.mxu0 0.0
        %435 = vmatpush2.msra.mxu0 0.0
        %436 = vmatprep.subr.mxu0 0.0
        %437 = vmatpush2.msra.mxu0 0.0
        %438 = vmatprep.subr.mxu0 0.0
        %439 = vmatpush2.msra.mxu0 0.0
        %440 = vmatprep.subr.mxu0 0.0
        %441 = vmatpush2.msra.mxu0 0.0
        %442 = vmatprep.subr.mxu0 0.0
        %443 = vmatpush2.msra.mxu0 0.0
        %444 = vmatprep.subr.mxu0 0.0
        %445 = vmatpush2.msra.mxu0 0.0
        %446 = vmatprep.subr.mxu0 0.0
        %447 = vmatpush2.msra.mxu0 0.0
        %448 = vmatprep.subr.mxu0 0.0
        %449 = vmatpush2.msra.mxu0 0.0
        %450 = vmatprep.subr.mxu0 0.0
        %451 = vmatpush2.msra.mxu0 0.0
        %452 = vmatprep.subr.mxu0 0.0
        %453 = vmatpush2.msra.mxu0 0.0
        %454 = vmatprep.subr.mxu0 0.0
        %455 = vmatpush2.msra.mxu0 0.0
        %456 = vmatprep.subr.mxu0 0.0
        %457 = vmatpush2.msra.mxu0 0.0
        %458 = vmatprep.mubr.f32.mxu0 0.0
        %v459 = vand.u32 %v230, 4294901760
        %v460 = vsub.f32 %v230, %v459
        %461 = vmatmul.mubr.f32.gmra.mxu0 %v460
        %v462 = vpop.f32.mrf.mxu0
        %v463 = vadd.f32 %v387, %v462
        %v464 = vpop.f32.mrf.mxu0
        %465 = vdwg.mxu0
        %466 = vmatprep.subr.mxu0 0.0
        %467 = vmatpush1.msra.mxu0 0.0
        %468 = vmatprep.subr.mxu0 0.0
        %469 = vmatpush1.msra.mxu0 0.0
        %470 = vmatprep.subr.mxu0 0.0
        %471 = vmatpush1.msra.mxu0 0.0
        %472 = vmatprep.subr.mxu0 0.0
        %473 = vmatpush1.msra.mxu0 0.0
        %474 = vmatprep.subr.mxu0 0.0
        %475 = vmatpush1.msra.mxu0 0.0
        %476 = vmatprep.subr.mxu0 0.0
        %477 = vmatpush1.msra.mxu0 0.0
        %478 = vmatprep.subr.mxu0 0.0
        %479 = vmatpush1.msra.mxu0 0.0
        %480 = vmatprep.subr.mxu0 0.0
        %481 = vmatpush1.msra.mxu0 0.0
        %482 = vmatprep.subr.mxu0 0.0
        %483 = vmatpush1.msra.mxu0 0.0
        %484 = vmatprep.subr.mxu0 0.0
        %485 = vmatpush1.msra.mxu0 0.0
        %486 = vmatprep.subr.mxu0 0.0
        %487 = vmatpush1.msra.mxu0 0.0
        %488 = vmatprep.subr.mxu0 0.0
        %489 = vmatpush1.msra.mxu0 0.0
        %490 = vmatprep.subr.mxu0 0.0
        %491 = vmatpush1.msra.mxu0 0.0
        %492 = vmatprep.subr.mxu0 0.0
        %493 = vmatpush1.msra.mxu0 0.0
        %494 = vmatprep.subr.mxu0 0.0
        %v495 = vand.u32 %v225, 4294901760
        %496 = vmatpush1.msra.mxu0 %v495
        %497 = vmatprep.subr.mxu0 0.0
        %v498 = vand.u32 %v224, 4294901760
        %499 = vmatpush1.msra.mxu0 %v498
        %500 = vmatprep.subr.mxu0 0.0
        %501 = vmatpush2.msra.mxu0 0.0
        %502 = vmatprep.subr.mxu0 0.0
        %503 = vmatpush2.msra.mxu0 0.0
        %504 = vmatprep.subr.mxu0 0.0
        %505 = vmatpush2.msra.mxu0 0.0
        %506 = vmatprep.subr.mxu0 0.0
        %507 = vmatpush2.msra.mxu0 0.0
        %508 = vmatprep.subr.mxu0 0.0
        %509 = vmatpush2.msra.mxu0 0.0
        %510 = vmatprep.subr.mxu0 0.0
        %511 = vmatpush2.msra.mxu0 0.0
        %512 = vmatprep.subr.mxu0 0.0
        %513 = vmatpush2.msra.mxu0 0.0
        %514 = vmatprep.subr.mxu0 0.0
        %515 = vmatpush2.msra.mxu0 0.0
        %516 = vmatprep.subr.mxu0 0.0
        %517 = vmatpush2.msra.mxu0 0.0
        %518 = vmatprep.subr.mxu0 0.0
        %519 = vmatpush2.msra.mxu0 0.0
        %520 = vmatprep.subr.mxu0 0.0
        %521 = vmatpush2.msra.mxu0 0.0
        %522 = vmatprep.subr.mxu0 0.0
        %523 = vmatpush2.msra.mxu0 0.0
        %524 = vmatprep.subr.mxu0 0.0
        %525 = vmatpush2.msra.mxu0 0.0
        %526 = vmatprep.subr.mxu0 0.0
        %527 = vmatpush2.msra.mxu0 0.0
        %528 = vmatprep.subr.mxu0 0.0
        %529 = vmatpush2.msra.mxu0 0.0
        %530 = vmatprep.subr.mxu0 0.0
        %531 = vmatpush2.msra.mxu0 0.0
        %532 = vmatprep.mubr.f32.mxu0 0.0
        %v533 = vand.u32 %v230, 4294901760
        %v534 = vsub.f32 %v230, %v533
        %v535 = vand.u32 %v534, 4294901760
        %536 = vmatmul.mubr.f32.gmra.mxu0 %v535
        %v537 = vpop.f32.mrf.mxu0
        %v538 = vadd.f32 %v463, %v537
        %v539 = vpop.f32.mrf.mxu0
        %540 = vdwg.mxu0
        %541 = vmatprep.subr.mxu0 0.0
        %542 = vmatpush1.msra.mxu0 0.0
        %543 = vmatprep.subr.mxu0 0.0
        %544 = vmatpush1.msra.mxu0 0.0
        %545 = vmatprep.subr.mxu0 0.0
        %546 = vmatpush1.msra.mxu0 0.0
        %547 = vmatprep.subr.mxu0 0.0
        %548 = vmatpush1.msra.mxu0 0.0
        %549 = vmatprep.subr.mxu0 0.0
        %550 = vmatpush1.msra.mxu0 0.0
        %551 = vmatprep.subr.mxu0 0.0
        %552 = vmatpush1.msra.mxu0 0.0
        %553 = vmatprep.subr.mxu0 0.0
        %554 = vmatpush1.msra.mxu0 0.0
        %555 = vmatprep.subr.mxu0 0.0
        %556 = vmatpush1.msra.mxu0 0.0
        %557 = vmatprep.subr.mxu0 0.0
        %558 = vmatpush1.msra.mxu0 0.0
        %559 = vmatprep.subr.mxu0 0.0
        %560 = vmatpush1.msra.mxu0 0.0
        %561 = vmatprep.subr.mxu0 0.0
        %562 = vmatpush1.msra.mxu0 0.0
        %563 = vmatprep.subr.mxu0 0.0
        %564 = vmatpush1.msra.mxu0 0.0
        %565 = vmatprep.subr.mxu0 0.0
        %566 = vmatpush1.msra.mxu0 0.0
        %567 = vmatprep.subr.mxu0 0.0
        %568 = vmatpush1.msra.mxu0 0.0
        %569 = vmatprep.subr.mxu0 0.0
        %v570 = vand.u32 %v225, 4294901760
        %v571 = vsub.f32 %v225, %v570
        %v572 = vand.u32 %v571, 4294901760
        %573 = vmatpush1.msra.mxu0 %v572
        %574 = vmatprep.subr.mxu0 0.0
        %v575 = vand.u32 %v224, 4294901760
        %v576 = vsub.f32 %v224, %v575
        %v577 = vand.u32 %v576, 4294901760
        %578 = vmatpush1.msra.mxu0 %v577
        %579 = vmatprep.subr.mxu0 0.0
        %580 = vmatpush2.msra.mxu0 0.0
        %581 = vmatprep.subr.mxu0 0.0
        %582 = vmatpush2.msra.mxu0 0.0
        %583 = vmatprep.subr.mxu0 0.0
        %584 = vmatpush2.msra.mxu0 0.0
        %585 = vmatprep.subr.mxu0 0.0
        %586 = vmatpush2.msra.mxu0 0.0
        %587 = vmatprep.subr.mxu0 0.0
        %588 = vmatpush2.msra.mxu0 0.0
        %589 = vmatprep.subr.mxu0 0.0
        %590 = vmatpush2.msra.mxu0 0.0
        %591 = vmatprep.subr.mxu0 0.0
        %592 = vmatpush2.msra.mxu0 0.0
        %593 = vmatprep.subr.mxu0 0.0
        %594 = vmatpush2.msra.mxu0 0.0
        %595 = vmatprep.subr.mxu0 0.0
        %596 = vmatpush2.msra.mxu0 0.0
        %597 = vmatprep.subr.mxu0 0.0
        %598 = vmatpush2.msra.mxu0 0.0
        %599 = vmatprep.subr.mxu0 0.0
        %600 = vmatpush2.msra.mxu0 0.0
        %601 = vmatprep.subr.mxu0 0.0
        %602 = vmatpush2.msra.mxu0 0.0
        %603 = vmatprep.subr.mxu0 0.0
        %604 = vmatpush2.msra.mxu0 0.0
        %605 = vmatprep.subr.mxu0 0.0
        %606 = vmatpush2.msra.mxu0 0.0
        %607 = vmatprep.subr.mxu0 0.0
        %608 = vmatpush2.msra.mxu0 0.0
        %609 = vmatprep.subr.mxu0 0.0
        %610 = vmatpush2.msra.mxu0 0.0
        %611 = vmatprep.mubr.f32.mxu0 0.0
        %v612 = vand.u32 %v230, 4294901760
        %613 = vmatmul.mubr.f32.gmra.mxu0 %v612
        %v614 = vpop.f32.mrf.mxu0
        %v615 = vadd.f32 %v538, %v614
        %v616 = vpop.f32.mrf.mxu0
        %617 = vdwg.mxu0
        %618 = vmatprep.subr.mxu0 0.0
        %619 = vmatpush1.msra.mxu0 0.0
        %620 = vmatprep.subr.mxu0 0.0
        %621 = vmatpush1.msra.mxu0 0.0
        %622 = vmatprep.subr.mxu0 0.0
        %623 = vmatpush1.msra.mxu0 0.0
        %624 = vmatprep.subr.mxu0 0.0
        %625 = vmatpush1.msra.mxu0 0.0
        %626 = vmatprep.subr.mxu0 0.0
        %627 = vmatpush1.msra.mxu0 0.0
        %628 = vmatprep.subr.mxu0 0.0
        %629 = vmatpush1.msra.mxu0 0.0
        %630 = vmatprep.subr.mxu0 0.0
        %631 = vmatpush1.msra.mxu0 0.0
        %632 = vmatprep.subr.mxu0 0.0
        %633 = vmatpush1.msra.mxu0 0.0
        %634 = vmatprep.subr.mxu0 0.0
        %635 = vmatpush1.msra.mxu0 0.0
        %636 = vmatprep.subr.mxu0 0.0
        %637 = vmatpush1.msra.mxu0 0.0
        %638 = vmatprep.subr.mxu0 0.0
        %639 = vmatpush1.msra.mxu0 0.0
        %640 = vmatprep.subr.mxu0 0.0
        %641 = vmatpush1.msra.mxu0 0.0
        %642 = vmatprep.subr.mxu0 0.0
        %643 = vmatpush1.msra.mxu0 0.0
        %644 = vmatprep.subr.mxu0 0.0
        %645 = vmatpush1.msra.mxu0 0.0
        %646 = vmatprep.subr.mxu0 0.0
        %v647 = vand.u32 %v225, 4294901760
        %648 = vmatpush1.msra.mxu0 %v647
        %649 = vmatprep.subr.mxu0 0.0
        %v650 = vand.u32 %v224, 4294901760
        %651 = vmatpush1.msra.mxu0 %v650
        %652 = vmatprep.subr.mxu0 0.0
        %653 = vmatpush2.msra.mxu0 0.0
        %654 = vmatprep.subr.mxu0 0.0
        %655 = vmatpush2.msra.mxu0 0.0
        %656 = vmatprep.subr.mxu0 0.0
        %657 = vmatpush2.msra.mxu0 0.0
        %658 = vmatprep.subr.mxu0 0.0
        %659 = vmatpush2.msra.mxu0 0.0
        %660 = vmatprep.subr.mxu0 0.0
        %661 = vmatpush2.msra.mxu0 0.0
        %662 = vmatprep.subr.mxu0 0.0
        %663 = vmatpush2.msra.mxu0 0.0
        %664 = vmatprep.subr.mxu0 0.0
        %665 = vmatpush2.msra.mxu0 0.0
        %666 = vmatprep.subr.mxu0 0.0
        %667 = vmatpush2.msra.mxu0 0.0
        %668 = vmatprep.subr.mxu0 0.0
        %669 = vmatpush2.msra.mxu0 0.0
        %670 = vmatprep.subr.mxu0 0.0
        %671 = vmatpush2.msra.mxu0 0.0
        %672 = vmatprep.subr.mxu0 0.0
        %673 = vmatpush2.msra.mxu0 0.0
        %674 = vmatprep.subr.mxu0 0.0
        %675 = vmatpush2.msra.mxu0 0.0
        %676 = vmatprep.subr.mxu0 0.0
        %677 = vmatpush2.msra.mxu0 0.0
        %678 = vmatprep.subr.mxu0 0.0
        %679 = vmatpush2.msra.mxu0 0.0
        %680 = vmatprep.subr.mxu0 0.0
        %681 = vmatpush2.msra.mxu0 0.0
        %682 = vmatprep.subr.mxu0 0.0
        %683 = vmatpush2.msra.mxu0 0.0
        %684 = vmatprep.mubr.f32.mxu0 0.0
        %v685 = vand.u32 %v230, 4294901760
        %686 = vmatmul.mubr.f32.gmra.mxu0 %v685
        %v687 = vpop.f32.mrf.mxu0
        %v688 = vadd.f32 %v615, %v687
        %v689 = vpop.f32.mrf.mxu0
        %690 = vdwg.mxu0
        %691 = vst [vmem:[%s222] sm:$0xff] %v688
        %s692 = sand.u32 %s117, 1
        %s693 = scalar_lea.sflag [#allocation5], %s692
        %s694 = sand.u32 %s117, 1
        %s695 = smul.addr %s694, 8
        %s696 = scalar_lea.vmem [#allocation8], %s695
        // Predicated region
        $region41: #{tpu_custom_call.1} parent=31 // pred_check
          %p697 = pneg %p127
        $region42: #{tpu_custom_call.1} parent=31 // pred_check_branch
          %699 = sbr.rel (%p697) target = $region44
        $region43: #{tpu_custom_call.1} parent=31 // pred_region
          %s701 = ssub.s32 128, 128
          %702 = vsyncadd %s693, %s701
          %s703 = sadd.s32 %s27, %s26
          %s704 = smul.addr %s703, 128
          %s705 = scalar_lea.hbm %s3, %s704
          %s707 = sshll.u32 %s696, 4
          %s708 = int_to_ptr.vmem [resolvable:$true] %s707
          %710 = dma.vmem_to_hbm [thread:$0]  %s708, 128, %s705, %s693
        $region44: #{tpu_custom_call.1} parent=31 // pred_fallthru
          _
      $region32: #{tpu_custom_call.1} parent=5 // pred_fallthru
        _
      %p711 = scmp.le.s32.totalorder 2, %s17
      // Predicated region
      $region45: #{tpu_custom_call.1} parent=5 // pred_check
        %p712 = pneg %p711
      $region46: #{tpu_custom_call.1} parent=5 // pred_check_branch
        %714 = sbr.rel (%p712) target = $region48
      $region47: #{tpu_custom_call.1} parent=5 // pred_region
        %s715 = ssub.s32 %s17, 2
        // Predicated region
        $region49: #{tpu_custom_call.1} parent=47 // pred_check
          %p716 = pneg %p133
        $region50: #{tpu_custom_call.1} parent=47 // pred_check_branch
          %718 = sbr.rel (%p716) target = $region52
        $region51: #{tpu_custom_call.1} parent=47 // pred_region
          %s719 = sand.u32 %s118, 1
          %s720 = scalar_lea.sflag [#allocation5], %s719
          %s721 = sand.u32 %s118, 1
          %s722 = smul.addr %s721, 8
          %s723 = scalar_lea.vmem [#allocation8], %s722
          %724 = dma.done %s720, 128
        $region52: #{tpu_custom_call.1} parent=47 // pred_fallthru
          _
      $region48: #{tpu_custom_call.1} parent=5 // pred_fallthru
        _
    $region6: #{tpu_custom_call.1} parent=1 // loop_footer
      %s21 = sadd.s32 1, %s17
    $region7: #{tpu_custom_call.1} parent=1 // loop_footer_branch
      %16 = sbr.rel target = $region3
    $region8: #{tpu_custom_call.1} parent=1 // loop_exit
      _
    %725 = vsyncpa [#allocation4], 1
    %s726 = scalar_lea.sflag [#allocation4], 1
    %727 = vsyncpa %s726, 1
    %728 = vsyncpa [#allocation7], 1
    %729 = vsyncpa [#allocation5], 1
    %s730 = scalar_lea.sflag [#allocation5], 1
    %731 = vsyncpa %s730, 1

</llo_original>
